<compile_context>
chip_gen: v5e
topology: v5e:2x2
jax: 0.10.0
libtpu: 0.0.40
codegen_flags: <defaults>
</compile_context>

<pallas_src>
import math

import jax
import jax.numpy as jnp
import numpy as np
from jax.experimental import pallas as pl
from jax.experimental.pallas import tpu as pltpu  # noqa: F401  (TPU backend)

# ----- model hyper-parameters (small, consistent with the module) -----
BATCH = 2
SEQ = 8
HIDDEN = 32
NUM_HEADS = 4
D_K = HIDDEN // NUM_HEADS
CYCLIC = 16
OUT_PAD = 128  # fused (o_proj | c_proj) output padded to a full lane tile


def cyclic_attention_kernel(xq_ref, xk_ref, xv_ref, w_qkv_ref, b_q_ref, mask_ref,
                            w_oc_ref, b_oc_ref, out_ref):
    # Per-stream projections. Weights are pre-transposed; 1/sqrt(d_k) is folded into the Q
    # weight/bias; b_k was dropped (softmax shift-invariant); b_v was folded into b_oc.
    q = jnp.dot(xq_ref[...], w_qkv_ref[0], preferred_element_type=jnp.float32) + b_q_ref[...]
    k = jnp.dot(xk_ref[...], w_qkv_ref[1], preferred_element_type=jnp.float32)
    v = jnp.dot(xv_ref[...], w_qkv_ref[2], preferred_element_type=jnp.float32)

    # Head-batched layout via the pack-time 0/1 head mask (1, NH, S, H):
    #   kb[b*NH + h, s, :] keeps only head h's lanes of K[b, s, :]; same for V.
    # No intra-vreg lane slices anywhere.
    mask = mask_ref[...]
    bn = BATCH * NUM_HEADS
    q4 = q.reshape(BATCH, 1, SEQ, HIDDEN)
    kb = (k.reshape(BATCH, 1, SEQ, HIDDEN) * mask).reshape(bn, SEQ, HIDDEN)
    vb = (v.reshape(BATCH, 1, SEQ, HIDDEN) * mask).reshape(bn, SEQ, HIDDEN)
    qb = jnp.broadcast_to(q4, (BATCH, NUM_HEADS, SEQ, HIDDEN)).reshape(bn, SEQ, HIDDEN)

    # All heads' scores and P·V in two single-batch-dim batched MXU calls (batch = B*NUM_HEADS).
    s = jnp.einsum("nqd,nkd->nqk", qb, kb, preferred_element_type=jnp.float32)   # (BN, S, S)
    s = s - jnp.max(s, axis=-1, keepdims=True)   # kept: input magnitudes not bounded by construction
    p = jnp.exp(s)
    p = p * pl.reciprocal(jnp.sum(p, axis=-1, keepdims=True), approx=True)
    o = jnp.einsum("nqk,nkd->nqd", p, vb, preferred_element_type=jnp.float32)    # (BN, S, H)

    # combine_heads: each head's output already sits in its own lane block -> sum over the head axis.
    combined = o.reshape(BATCH, NUM_HEADS, SEQ, HIDDEN).sum(axis=1).reshape(BATCH * SEQ, HIDDEN)

    # Fused [o_proj | c_proj | zero-pad] -> one lane-dense (B*S, 128) unmasked store.
    out = jnp.dot(combined, w_oc_ref[...], preferred_element_type=jnp.float32) + b_oc_ref[...]
    out_ref[...] = out.astype(out_ref.dtype)


def pack_params(params):
    """One-time parameter transform: pre-transpose, stack, fold scale and removable biases."""
    wq, bq, wk, bk, wv, bv, wo, bo, wc, bc = params
    inv_sqrt_dk = 1.0 / math.sqrt(D_K)

    # Stacked pre-transposed projection weights (kernel computes x @ W); q-scale folded in.
    w_qkv3 = jnp.stack([wq.T * inv_sqrt_dk, wk.T, wv.T])               # (3, H, H)
    b_q = bq * inv_sqrt_dk                                             # (1, H)
    # b_k dropped: it only shifts each score row by a constant -> softmax invariant.
    # b_v folded below: softmax rows sum to 1, so it passes through attention unchanged.

    # 0/1 head-selector mask, pre-broadcast over SEQ so the kernel only broadcasts over batch.
    mask2d = (jnp.arange(HIDDEN)[None, :] // D_K ==
              jnp.arange(NUM_HEADS)[:, None]).astype(jnp.float32)      # (NH, H)
    head_mask = jnp.broadcast_to(mask2d[:, None, :],
                                 (NUM_HEADS, SEQ, HIDDEN))[None]       # (1, NH, S, H)

    # Fused [o_proj | c_proj] weight, pre-transposed and zero-padded to 128 lanes.
    w_oc = jnp.zeros((HIDDEN, OUT_PAD), jnp.float32)
    w_oc = w_oc.at[:, :HIDDEN].set(wo.T)
    w_oc = w_oc.at[:, HIDDEN:HIDDEN + CYCLIC].set(wc.T)
    b_oc = jnp.zeros((1, OUT_PAD), jnp.float32)
    b_oc = b_oc.at[:, :HIDDEN].set(bo + bv @ wo.T)                     # b_v folded in
    b_oc = b_oc.at[:, HIDDEN:HIDDEN + CYCLIC].set(bc + bv @ wc.T)
    return w_qkv3, b_q, head_mask, w_oc, b_oc


@jax.jit
def cyclic_attention(q, k, v, packed):
    """q, k, v: [B, S, H] float32.  Returns (c: [B, S, CYCLIC], h: [B, S, H])."""
    B, S, H = q.shape
    w_qkv3, b_q, head_mask, w_oc, b_oc = packed

    # Free reshapes only (no concat HLO): fold batch onto sublanes for each stream.
    xq = q.reshape(B * S, H)
    xk = k.reshape(B * S, H)
    xv = v.reshape(B * S, H)

    # Single invocation, whole problem resident in VMEM: no grid, no pipelining machinery.
    out = pl.pallas_call(
        cyclic_attention_kernel,
        out_shape=jax.ShapeDtypeStruct((B * S, OUT_PAD), jnp.float32),
    )(xq, xk, xv, w_qkv3, b_q, head_mask, w_oc, b_oc)

    h = out[:, :H].reshape(B, S, H)
    c = out[:, H:H + CYCLIC].reshape(B, S, CYCLIC)
    return c, h


def reference(q, k, v, params):
    """Pure-JAX reference matching the PyTorch forward (uses the original params)."""
    wq, bq, wk, bk, wv, bv, wo, bo, wc, bc = params
    B, S, H = q.shape

    def lin(x, w, b):
        return x @ w.T + b[0]

    def split(x):
        return x.reshape(B, S, NUM_HEADS, D_K).transpose(0, 2, 1, 3)

    Q, K, V = split(lin(q, wq, bq)), split(lin(k, wk, bk)), split(lin(v, wv, bv))
    scores = jnp.einsum("bhqd,bhkd->bhqk", Q, K) / math.sqrt(D_K)
    probs = jax.nn.softmax(scores, axis=-1)
    out = jnp.einsum("bhqk,bhkd->bhqd", probs, V)
    comb = out.transpose(0, 2, 1, 3).reshape(B, S, H)
    return lin(comb, wc, bc), lin(comb, wo, bo)


def init_params(key):
    """Deterministic parameter init (uniform, PyTorch-Linear-like bounds)."""
    keys = jax.random.split(key, 10)
    bound_h = 1.0 / math.sqrt(HIDDEN)

    def u(k, shape, bound):
        return jax.random.uniform(k, shape, jnp.float32, -bound, bound)

    wq = u(keys[0], (HIDDEN, HIDDEN), bound_h)
    bq = u(keys[1], (1, HIDDEN), bound_h)
    wk = u(keys[2], (HIDDEN, HIDDEN), bound_h)
    bk = u(keys[3], (1, HIDDEN), bound_h)
    wv = u(keys[4], (HIDDEN, HIDDEN), bound_h)
    bv = u(keys[5], (1, HIDDEN), bound_h)
    wo = u(keys[6], (HIDDEN, HIDDEN), bound_h)
    bo = u(keys[7], (1, HIDDEN), bound_h)
    wc = u(keys[8], (CYCLIC, HIDDEN), bound_h)
    bc = u(keys[9], (1, CYCLIC), bound_h)
    return (wq, bq, wk, bk, wv, bv, wo, bo, wc, bc)


if __name__ == "__main__":
    key = jax.random.PRNGKey(0)
    kq, kk, kv, kp = jax.random.split(key, 4)

    q = jax.random.normal(kq, (BATCH, SEQ, HIDDEN), jnp.float32)
    k = jax.random.normal(kk, (BATCH, SEQ, HIDDEN), jnp.float32)
    v = jax.random.normal(kv, (BATCH, SEQ, HIDDEN), jnp.float32)
    params = init_params(kp)
    packed = pack_params(params)

    c_out, h_out = cyclic_attention(q, k, v, packed)
    jax.block_until_ready((c_out, h_out))

    c_ref, h_ref = reference(q, k, v, params)
    # Tolerance reflects the EUP approximate reciprocal in the softmax denominator and the
    # (mathematically exact, numerically rounding-level) b_k / b_v bias folds.
    np.testing.assert_allclose(np.asarray(c_out), np.asarray(c_ref), rtol=5e-3, atol=5e-3)
    np.testing.assert_allclose(np.asarray(h_out), np.asarray(h_ref), rtol=5e-3, atol=5e-3)

    print("KERNEL_OK")
</pallas_src>

<mosaic_0001>
module attributes {stable_mosaic.version = 11 : i64} {
  func.func @cyclic_attention_kernel(%arg0: memref<16x32xf32, #tpu.memory_space<vmem>>, %arg1: memref<16x32xf32, #tpu.memory_space<vmem>>, %arg2: memref<16x32xf32, #tpu.memory_space<vmem>>, %arg3: memref<3x32x32xf32, #tpu.memory_space<vmem>>, %arg4: memref<1x32xf32, #tpu.memory_space<vmem>>, %arg5: memref<1x4x8x32xf32, #tpu.memory_space<vmem>>, %arg6: memref<32x128xf32, #tpu.memory_space<vmem>>, %arg7: memref<1x128xf32, #tpu.memory_space<vmem>>, %arg8: memref<16x128xf32, #tpu.memory_space<vmem>>) attributes {dimension_semantics = [], scalar_prefetch = 0 : i64, scratch_operands = 0 : i64, tpu.core_type = #tpu.core_type<tc>} {
    %c0 = arith.constant 0 : index
    %c0_0 = arith.constant 0 : index
    %0 = vector.load %arg0[%c0, %c0_0] : memref<16x32xf32, #tpu.memory_space<vmem>>, vector<16x32xf32>
    %c0_1 = arith.constant 0 : index
    %c0_2 = arith.constant 0 : index
    %c0_3 = arith.constant 0 : index
    %1 = vector.load %arg3[%c0_1, %c0_2, %c0_3] : memref<3x32x32xf32, #tpu.memory_space<vmem>>, vector<1x32x32xf32>
    %2 = vector.shape_cast %1 : vector<1x32x32xf32> to vector<32x32xf32>
    %cst = arith.constant dense<0.000000e+00> : vector<16x32xf32>
    %3 = tpu.matmul %0, %2, %cst {dimension_numbers = #tpu.dot_dimension_numbers<[1], [0], [0], [1], [0, 0, 1, 1], [], []>} : vector<16x32xf32>, vector<32x32xf32>, vector<16x32xf32> -> vector<16x32xf32>
    %c0_4 = arith.constant 0 : index
    %c0_5 = arith.constant 0 : index
    %4 = vector.load %arg4[%c0_4, %c0_5] : memref<1x32xf32, #tpu.memory_space<vmem>>, vector<1x32xf32>
    %5 = vector.broadcast %4 : vector<1x32xf32> to vector<16x32xf32>
    %6 = arith.addf %3, %5 : vector<16x32xf32>
    %c0_6 = arith.constant 0 : index
    %c0_7 = arith.constant 0 : index
    %7 = vector.load %arg1[%c0_6, %c0_7] : memref<16x32xf32, #tpu.memory_space<vmem>>, vector<16x32xf32>
    %c1 = arith.constant 1 : index
    %c0_8 = arith.constant 0 : index
    %c0_9 = arith.constant 0 : index
    %8 = vector.load %arg3[%c1, %c0_8, %c0_9] : memref<3x32x32xf32, #tpu.memory_space<vmem>>, vector<1x32x32xf32>
    %9 = vector.shape_cast %8 : vector<1x32x32xf32> to vector<32x32xf32>
    %cst_10 = arith.constant dense<0.000000e+00> : vector<16x32xf32>
    %10 = tpu.matmul %7, %9, %cst_10 {dimension_numbers = #tpu.dot_dimension_numbers<[1], [0], [0], [1], [0, 0, 1, 1], [], []>} : vector<16x32xf32>, vector<32x32xf32>, vector<16x32xf32> -> vector<16x32xf32>
    %c0_11 = arith.constant 0 : index
    %c0_12 = arith.constant 0 : index
    %11 = vector.load %arg2[%c0_11, %c0_12] : memref<16x32xf32, #tpu.memory_space<vmem>>, vector<16x32xf32>
    %c2 = arith.constant 2 : index
    %c0_13 = arith.constant 0 : index
    %c0_14 = arith.constant 0 : index
    %12 = vector.load %arg3[%c2, %c0_13, %c0_14] : memref<3x32x32xf32, #tpu.memory_space<vmem>>, vector<1x32x32xf32>
    %13 = vector.shape_cast %12 : vector<1x32x32xf32> to vector<32x32xf32>
    %cst_15 = arith.constant dense<0.000000e+00> : vector<16x32xf32>
    %14 = tpu.matmul %11, %13, %cst_15 {dimension_numbers = #tpu.dot_dimension_numbers<[1], [0], [0], [1], [0, 0, 1, 1], [], []>} : vector<16x32xf32>, vector<32x32xf32>, vector<16x32xf32> -> vector<16x32xf32>
    %c0_16 = arith.constant 0 : index
    %c0_17 = arith.constant 0 : index
    %c0_18 = arith.constant 0 : index
    %c0_19 = arith.constant 0 : index
    %15 = vector.load %arg5[%c0_16, %c0_17, %c0_18, %c0_19] : memref<1x4x8x32xf32, #tpu.memory_space<vmem>>, vector<1x4x8x32xf32>
    %16 = vector.shape_cast %6 : vector<16x32xf32> to vector<2x1x8x32xf32>
    %17 = vector.shape_cast %10 : vector<16x32xf32> to vector<2x1x8x32xf32>
    %18 = vector.broadcast %17 : vector<2x1x8x32xf32> to vector<2x4x8x32xf32>
    %19 = vector.broadcast %15 : vector<1x4x8x32xf32> to vector<2x4x8x32xf32>
    %20 = arith.mulf %18, %19 : vector<2x4x8x32xf32>
    %21 = vector.shape_cast %20 : vector<2x4x8x32xf32> to vector<8x8x32xf32>
    %22 = vector.shape_cast %14 : vector<16x32xf32> to vector<2x1x8x32xf32>
    %23 = vector.broadcast %22 : vector<2x1x8x32xf32> to vector<2x4x8x32xf32>
    %24 = vector.broadcast %15 : vector<1x4x8x32xf32> to vector<2x4x8x32xf32>
    %25 = arith.mulf %23, %24 : vector<2x4x8x32xf32>
    %26 = vector.shape_cast %25 : vector<2x4x8x32xf32> to vector<8x8x32xf32>
    %27 = vector.shape_cast %16 : vector<2x1x8x32xf32> to vector<2x1x8x32xf32>
    %28 = vector.broadcast %27 : vector<2x1x8x32xf32> to vector<2x4x8x32xf32>
    %29 = vector.shape_cast %28 : vector<2x4x8x32xf32> to vector<8x8x32xf32>
    "tpu.trace_start"() <{level = 10 : i32, message = "nqd,nkd->nqk"}> : () -> ()
    %cst_20 = arith.constant dense<0.000000e+00> : vector<8x8x8xf32>
    %30 = tpu.matmul %29, %21, %cst_20 {dimension_numbers = #tpu.dot_dimension_numbers<[2], [2], [1], [1], [0, 0, 0, 1, 1, 1], [0], [0]>} : vector<8x8x32xf32>, vector<8x8x32xf32>, vector<8x8x8xf32> -> vector<8x8x8xf32>
    "tpu.trace_stop"() : () -> ()
    %cst_21 = arith.constant dense<0xFF800000> : vector<8x8xf32>
    %31 = vector.multi_reduction <maximumf>, %30, %cst_21 [2] : vector<8x8x8xf32> to vector<8x8xf32>
    %32 = vector.shape_cast %31 : vector<8x8xf32> to vector<8x8x1xf32>
    %33 = vector.broadcast %32 : vector<8x8x1xf32> to vector<8x8x8xf32>
    %34 = arith.subf %30, %33 : vector<8x8x8xf32>
    %35 = math.exp %34 : vector<8x8x8xf32>
    %cst_22 = arith.constant dense<0.000000e+00> : vector<8x8xf32>
    %36 = vector.multi_reduction <add>, %35, %cst_22 [2] : vector<8x8x8xf32> to vector<8x8xf32>
    %37 = vector.shape_cast %36 : vector<8x8xf32> to vector<8x8x1xf32>
    %38 = tpu.reciprocal %37 {approx = true} : vector<8x8x1xf32> -> vector<8x8x1xf32>
    %39 = vector.broadcast %38 : vector<8x8x1xf32> to vector<8x8x8xf32>
    %40 = arith.mulf %35, %39 : vector<8x8x8xf32>
    "tpu.trace_start"() <{level = 10 : i32, message = "nqk,nkd->nqd"}> : () -> ()
    %cst_23 = arith.constant dense<0.000000e+00> : vector<8x8x32xf32>
    %41 = tpu.matmul %40, %26, %cst_23 {dimension_numbers = #tpu.dot_dimension_numbers<[2], [1], [1], [2], [0, 0, 0, 1, 1, 2], [0], [0]>} : vector<8x8x8xf32>, vector<8x8x32xf32>, vector<8x8x32xf32> -> vector<8x8x32xf32>
    "tpu.trace_stop"() : () -> ()
    %42 = vector.shape_cast %41 : vector<8x8x32xf32> to vector<2x4x8x32xf32>
    %cst_24 = arith.constant dense<0.000000e+00> : vector<2x8x32xf32>
    %43 = vector.multi_reduction <add>, %42, %cst_24 [1] : vector<2x4x8x32xf32> to vector<2x8x32xf32>
    %44 = vector.shape_cast %43 : vector<2x8x32xf32> to vector<16x32xf32>
    %c0_25 = arith.constant 0 : index
    %c0_26 = arith.constant 0 : index
    %45 = vector.load %arg6[%c0_25, %c0_26] : memref<32x128xf32, #tpu.memory_space<vmem>>, vector<32x128xf32>
    %cst_27 = arith.constant dense<0.000000e+00> : vector<16x128xf32>
    %46 = tpu.matmul %44, %45, %cst_27 {dimension_numbers = #tpu.dot_dimension_numbers<[1], [0], [0], [1], [0, 0, 1, 1], [], []>} : vector<16x32xf32>, vector<32x128xf32>, vector<16x128xf32> -> vector<16x128xf32>
    %c0_28 = arith.constant 0 : index
    %c0_29 = arith.constant 0 : index
    %47 = vector.load %arg7[%c0_28, %c0_29] : memref<1x128xf32, #tpu.memory_space<vmem>>, vector<1x128xf32>
    %48 = vector.broadcast %47 : vector<1x128xf32> to vector<16x128xf32>
    %49 = arith.addf %46, %48 : vector<16x128xf32>
    %c0_30 = arith.constant 0 : index
    %c0_31 = arith.constant 0 : index
    %50 = vector.load %arg8[%c0_30, %c0_31] : memref<16x128xf32, #tpu.memory_space<vmem>>, vector<16x128xf32>
    tpu.vector_store %arg8[%c0_30, %c0_31], %49 {strides = array<i32>} : memref<16x128xf32, #tpu.memory_space<vmem>>, vector<16x128xf32>,
    return
  }
}

</mosaic_0001>

<llo_original>
// kernel: cyclic_attention.1
$region0: #{cyclic_attention.1}
  #allocation0 [shape = 'u32[]', space=smem, size = 0x4, offset = 0x4, fixed_abs, tag = 'smem constant byte address 0x4 - core index']
  #allocation1 [shape = 'u32[72,128]{1,0:T(1,128)}', space=vmem, size = 0x9000, scoped, tag = 'internal scratch']
  %s0 = inlined_call_operand.hbm [shape: f32[16,32], index: 0, kind: input, shape index: {}]
  %s1 = inlined_call_operand.hbm [shape: f32[16,32], index: 1, kind: input, shape index: {}]
  %s2 = inlined_call_operand.hbm [shape: f32[16,32], index: 2, kind: input, shape index: {}]
  %s3 = inlined_call_operand.hbm [shape: f32[3,32,32], index: 3, kind: input, shape index: {}]
  %s4 = inlined_call_operand.vmem [shape: f32[1,32], index: 4, kind: input, shape index: {}]
  %s5 = inlined_call_operand.hbm [shape: f32[1,4,8,32], index: 5, kind: input, shape index: {}]
  %s6 = inlined_call_operand.hbm [shape: f32[32,128], index: 6, kind: input, shape index: {}]
  %s7 = inlined_call_operand.vmem [shape: f32[1,128], index: 7, kind: input, shape index: {}]
  %s8 = inlined_call_operand.vmem [shape: f32[16,128], index: 8, kind: output, shape index: {}]
  %s9 = sld [smem:[#allocation0]]
  $region66: #{cyclic_attention.1} parent=0
    _
  %s11 = ssub.s32 1, %s9
  %s12 = scalar_select 0, %s11, %s9
  $region1: #{cyclic_attention.1} parent=0
    #allocation2 [shape = 'u8[8192]{0}', space=vmem, size = 0x2000, scoped, tag = 'input window, operand 0, single buffered']
    #allocation3 [shape = 's32[1]{0}', space=sflag, size = 0x4, scoped, tag = 'scoped memory for cyclic_attention.1']
    #allocation4 [shape = 'u8[8192]{0}', space=vmem, size = 0x2000, scoped, tag = 'input window, operand 1, single buffered']
    #allocation5 [shape = 's32[1]{0}', space=sflag, size = 0x4, scoped, tag = 'scoped memory for cyclic_attention.1']
    #allocation6 [shape = 'u8[8192]{0}', space=vmem, size = 0x2000, scoped, tag = 'input window, operand 2, single buffered']
    #allocation7 [shape = 'u8[49152]{0}', space=vmem, size = 0xc000, scoped, tag = 'input window, operand 3, single buffered']
    #allocation8 [shape = 's32[1]{0}', space=sflag, size = 0x4, scoped, tag = 'scoped memory for cyclic_attention.1']
    #allocation9 [shape = 'u8[16384]{0}', space=vmem, size = 0x4000, scoped, tag = 'input window, operand 5, single buffered']
    #allocation10 [shape = 'u8[16384]{0}', space=vmem, size = 0x4000, scoped, tag = 'input window, operand 6, single buffered']
    #allocation11 [shape = 's32[1]{0}', space=sflag, size = 0x4, scoped, tag = 'scoped memory for cyclic_attention.1']
    %13 = vsyncpa [#allocation3], 0
    %14 = vsyncpa [#allocation5], 0
    %15 = vsyncpa [#allocation8], 0
    %16 = vsyncpa [#allocation11], 0
    // Predicated region
    $region2: #{cyclic_attention.1} parent=1 // pred_check
      _
    $region3: #{cyclic_attention.1} parent=1 // pred_check_branch
      %18 = sbr.rel (0) target = $region5
    $region4: #{cyclic_attention.1} parent=1 // pred_region
      %20 = vsyncadd [#allocation3], 0
      %s21 = sshll.u32 %s0, 4
      %s22 = int_to_ptr.hbm [resolvable:$true] %s21
      %s23 = sshll.u32 [#allocation2], 4
      %s24 = int_to_ptr.vmem [resolvable:$true] %s23
      %29 = dma.hbm_to_vmem [thread:$0]  %s22, 256, %s24, [#allocation3], 128, 128, 8
    $region5: #{cyclic_attention.1} parent=1 // pred_fallthru
      _
    // Predicated region
    $region6: #{cyclic_attention.1} parent=1 // pred_check
      _
    $region7: #{cyclic_attention.1} parent=1 // pred_check_branch
      %31 = sbr.rel (0) target = $region9
    $region8: #{cyclic_attention.1} parent=1 // pred_region
      %33 = vsyncadd [#allocation5], 0
      %s34 = sshll.u32 %s1, 4
      %s35 = int_to_ptr.hbm [resolvable:$true] %s34
      %s36 = sshll.u32 [#allocation4], 4
      %s37 = int_to_ptr.vmem [resolvable:$true] %s36
      %42 = dma.hbm_to_vmem [thread:$0]  %s35, 256, %s37, [#allocation5], 128, 128, 8
    $region9: #{cyclic_attention.1} parent=1 // pred_fallthru
      _
    // Predicated region
    $region10: #{cyclic_attention.1} parent=1 // pred_check
      _
    $region11: #{cyclic_attention.1} parent=1 // pred_check_branch
      %44 = sbr.rel (0) target = $region13
    $region12: #{cyclic_attention.1} parent=1 // pred_region
      %46 = vsyncadd [#allocation5], 0
      %s47 = sshll.u32 %s2, 4
      %s48 = int_to_ptr.hbm [resolvable:$true] %s47
      %s49 = sshll.u32 [#allocation6], 4
      %s50 = int_to_ptr.vmem [resolvable:$true] %s49
      %55 = dma.hbm_to_vmem [thread:$0]  %s48, 256, %s50, [#allocation5], 128, 128, 8
    $region13: #{cyclic_attention.1} parent=1 // pred_fallthru
      _
    // Predicated region
    $region14: #{cyclic_attention.1} parent=1 // pred_check
      _
    $region15: #{cyclic_attention.1} parent=1 // pred_check_branch
      %57 = sbr.rel (0) target = $region17
    $region16: #{cyclic_attention.1} parent=1 // pred_region
      %59 = vsyncadd [#allocation8], 0
      %s60 = sshll.u32 %s3, 4
      %s61 = int_to_ptr.hbm [resolvable:$true] %s60
      %s62 = sshll.u32 [#allocation7], 4
      %s63 = int_to_ptr.vmem [resolvable:$true] %s62
      %68 = dma.hbm_to_vmem [thread:$0]  %s61, 1536, %s63, [#allocation8], 128, 128, 8
    $region17: #{cyclic_attention.1} parent=1 // pred_fallthru
      _
    // Predicated region
    $region18: #{cyclic_attention.1} parent=1 // pred_check
      _
    $region19: #{cyclic_attention.1} parent=1 // pred_check_branch
      %70 = sbr.rel (0) target = $region21
    $region20: #{cyclic_attention.1} parent=1 // pred_region
      _
    $region21: #{cyclic_attention.1} parent=1 // pred_fallthru
      _
    // Predicated region
    $region22: #{cyclic_attention.1} parent=1 // pred_check
      _
    $region23: #{cyclic_attention.1} parent=1 // pred_check_branch
      %72 = sbr.rel (0) target = $region25
    $region24: #{cyclic_attention.1} parent=1 // pred_region
      %74 = vsyncadd [#allocation8], 0
      %s75 = sshll.u32 %s5, 4
      %s76 = int_to_ptr.hbm [resolvable:$true] %s75
      %s77 = sshll.u32 [#allocation9], 4
      %s78 = int_to_ptr.vmem [resolvable:$true] %s77
      %83 = dma.hbm_to_vmem [thread:$0]  %s76, 512, %s78, [#allocation8], 128, 128, 8
    $region25: #{cyclic_attention.1} parent=1 // pred_fallthru
      _
    // Predicated region
    $region26: #{cyclic_attention.1} parent=1 // pred_check
      _
    $region27: #{cyclic_attention.1} parent=1 // pred_check_branch
      %85 = sbr.rel (0) target = $region29
    $region28: #{cyclic_attention.1} parent=1 // pred_region
      %87 = vsyncadd [#allocation11], 0
      %s88 = sshll.u32 %s6, 4
      %s89 = int_to_ptr.hbm [resolvable:$true] %s88
      %s90 = sshll.u32 [#allocation10], 4
      %s91 = int_to_ptr.vmem [resolvable:$true] %s90
      %96 = dma.hbm_to_vmem [thread:$0]  %s89, 512, %s91, [#allocation11], 128, 128, 8
    $region29: #{cyclic_attention.1} parent=1 // pred_fallthru
      _
    // Predicated region
    $region30: #{cyclic_attention.1} parent=1 // pred_check
      _
    $region31: #{cyclic_attention.1} parent=1 // pred_check_branch
      %98 = sbr.rel (0) target = $region33
    $region32: #{cyclic_attention.1} parent=1 // pred_region
      _
    $region33: #{cyclic_attention.1} parent=1 // pred_fallthru
      _
    // Predicated region
    $region34: #{cyclic_attention.1} parent=1 // pred_check
      _
    $region35: #{cyclic_attention.1} parent=1 // pred_check_branch
      %100 = sbr.rel (0) target = $region37
    $region36: #{cyclic_attention.1} parent=1 // pred_region
      %102 = dma.done [#allocation3], 256
    $region37: #{cyclic_attention.1} parent=1 // pred_fallthru
      _
    // Predicated region
    $region38: #{cyclic_attention.1} parent=1 // pred_check
      _
    $region39: #{cyclic_attention.1} parent=1 // pred_check_branch
      %104 = sbr.rel (0) target = $region41
    $region40: #{cyclic_attention.1} parent=1 // pred_region
      %106 = dma.done [#allocation5], 256
    $region41: #{cyclic_attention.1} parent=1 // pred_fallthru
      _
    // Predicated region
    $region42: #{cyclic_attention.1} parent=1 // pred_check
      _
    $region43: #{cyclic_attention.1} parent=1 // pred_check_branch
      %108 = sbr.rel (0) target = $region45
    $region44: #{cyclic_attention.1} parent=1 // pred_region
      %110 = dma.done [#allocation5], 256
    $region45: #{cyclic_attention.1} parent=1 // pred_fallthru
      _
    // Predicated region
    $region46: #{cyclic_attention.1} parent=1 // pred_check
      _
    $region47: #{cyclic_attention.1} parent=1 // pred_check_branch
      %112 = sbr.rel (0) target = $region49
    $region48: #{cyclic_attention.1} parent=1 // pred_region
      %114 = dma.done [#allocation8], 1536
    $region49: #{cyclic_attention.1} parent=1 // pred_fallthru
      _
    // Predicated region
    $region50: #{cyclic_attention.1} parent=1 // pred_check
      _
    $region51: #{cyclic_attention.1} parent=1 // pred_check_branch
      %116 = sbr.rel (0) target = $region53
    $region52: #{cyclic_attention.1} parent=1 // pred_region
      %118 = dma.done [#allocation8], 512
    $region53: #{cyclic_attention.1} parent=1 // pred_fallthru
      _
    // Predicated region
    $region54: #{cyclic_attention.1} parent=1 // pred_check
      _
    $region55: #{cyclic_attention.1} parent=1 // pred_check_branch
      %120 = sbr.rel (0) target = $region57
    $region56: #{cyclic_attention.1} parent=1 // pred_region
      %122 = dma.done [#allocation11], 512
    $region57: #{cyclic_attention.1} parent=1 // pred_fallthru
      _
    %v123 = vld [vmem:[#allocation2] sm:$0xff]
    %v124 = vld [vmem:[#allocation2 + $0x8] sm:$0xff]
    %v125 = vld [vmem:[#allocation7] sm:$0xff]
    %v126 = vld [vmem:[#allocation7 + $0x8] sm:$0xff]
    %v127 = vld [vmem:[#allocation7 + $0x10] sm:$0xff]
    %v128 = vld [vmem:[#allocation7 + $0x18] sm:$0xff]
    %v129 = vld [vmem:[%s4] sm:$0x1]
    %v131 = vperm.slane %v129, 0
    %vm133 = vcmask 261120
    %v135 = vsel %vm133, %v123, 0
    %v138 = vsel %vm133, %v124, 0
    %140 = vmatpush.msra.mxu0 0.0
    %141 = vmatpush.msra.mxu0 0.0
    %142 = vmatpush.msra.mxu0 0.0
    %143 = vmatpush.msra.mxu0 0.0
    %144 = vmatpush.msra.mxu0 0.0
    %145 = vmatpush.msra.mxu0 0.0
    %146 = vmatpush.msra.mxu0 0.0
    %147 = vmatpush.msra.mxu0 0.0
    %148 = vmatpush.msra.mxu0 0.0
    %149 = vmatpush.msra.mxu0 0.0
    %150 = vmatpush.msra.mxu0 0.0
    %151 = vmatpush.msra.mxu0 0.0
    %152 = vmatpush.msra.mxu0 %v128
    %153 = vmatpush.msra.mxu0 %v127
    %154 = vmatpush.msra.mxu0 %v126
    %155 = vmatpush.msra.mxu0 %v125
    %156 = vmatmul.f32.gmra.mxu0 %v135
    %v157 = vpop.f32.mrf.mxu0
    %v158 = vadd.f32 %v131, %v157
    %159 = vmatmul.f32.gmra.mxu0 %v138
    %v160 = vpop.f32.mrf.mxu0
    %v161 = vadd.f32 %v131, %v160
    %162 = vdwg.mxu0
    %v163 = vld [vmem:[#allocation4] sm:$0xff]
    %v164 = vld [vmem:[#allocation4 + $0x8] sm:$0xff]
    %s165 = scalar_lea.vmem [#allocation7], 32
    %v166 = vld [vmem:[%s165] sm:$0xff]
    %v167 = vld [vmem:[%s165 + $0x8] sm:$0xff]
    %v168 = vld [vmem:[%s165 + $0x10] sm:$0xff]
    %v169 = vld [vmem:[%s165 + $0x18] sm:$0xff]
    %v171 = vsel %vm133, %v163, 0
    %v174 = vsel %vm133, %v164, 0
    %176 = vmatpush.msra.mxu0 0.0
    %177 = vmatpush.msra.mxu0 0.0
    %178 = vmatpush.msra.mxu0 0.0
    %179 = vmatpush.msra.mxu0 0.0
    %180 = vmatpush.msra.mxu0 0.0
    %181 = vmatpush.msra.mxu0 0.0
    %182 = vmatpush.msra.mxu0 0.0
    %183 = vmatpush.msra.mxu0 0.0
    %184 = vmatpush.msra.mxu0 0.0
    %185 = vmatpush.msra.mxu0 0.0
    %186 = vmatpush.msra.mxu0 0.0
    %187 = vmatpush.msra.mxu0 0.0
    %188 = vmatpush.msra.mxu0 %v169
    %189 = vmatpush.msra.mxu0 %v168
    %190 = vmatpush.msra.mxu0 %v167
    %191 = vmatpush.msra.mxu0 %v166
    %192 = vmatmul.f32.gmra.mxu0 %v171
    %v193 = vpop.f32.mrf.mxu0
    %v194 = vadd.f32 0.0, %v193
    %195 = vmatmul.f32.gmra.mxu0 %v174
    %v196 = vpop.f32.mrf.mxu0
    %v197 = vadd.f32 0.0, %v196
    %198 = vdwg.mxu0
    %v199 = vld [vmem:[#allocation6] sm:$0xff]
    %v200 = vld [vmem:[#allocation6 + $0x8] sm:$0xff]
    %s201 = scalar_lea.vmem [#allocation7], 64
    %v202 = vld [vmem:[%s201] sm:$0xff]
    %v203 = vld [vmem:[%s201 + $0x8] sm:$0xff]
    %v204 = vld [vmem:[%s201 + $0x10] sm:$0xff]
    %v205 = vld [vmem:[%s201 + $0x18] sm:$0xff]
    %v207 = vsel %vm133, %v199, 0
    %v210 = vsel %vm133, %v200, 0
    %212 = vmatpush.msra.mxu0 0.0
    %213 = vmatpush.msra.mxu0 0.0
    %214 = vmatpush.msra.mxu0 0.0
    %215 = vmatpush.msra.mxu0 0.0
    %216 = vmatpush.msra.mxu0 0.0
    %217 = vmatpush.msra.mxu0 0.0
    %218 = vmatpush.msra.mxu0 0.0
    %219 = vmatpush.msra.mxu0 0.0
    %220 = vmatpush.msra.mxu0 0.0
    %221 = vmatpush.msra.mxu0 0.0
    %222 = vmatpush.msra.mxu0 0.0
    %223 = vmatpush.msra.mxu0 0.0
    %224 = vmatpush.msra.mxu0 %v205
    %225 = vmatpush.msra.mxu0 %v204
    %226 = vmatpush.msra.mxu0 %v203
    %227 = vmatpush.msra.mxu0 %v202
    %228 = vmatmul.f32.gmra.mxu0 %v207
    %v229 = vpop.f32.mrf.mxu0
    %v230 = vadd.f32 0.0, %v229
    %231 = vmatmul.f32.gmra.mxu0 %v210
    %v232 = vpop.f32.mrf.mxu0
    %v233 = vadd.f32 0.0, %v232
    %234 = vdwg.mxu0
    %v235 = vld [vmem:[#allocation9] sm:$0xff]
    %v236 = vld [vmem:[#allocation9 + $0x8] sm:$0xff]
    %v237 = vld [vmem:[#allocation9 + $0x10] sm:$0xff]
    %v238 = vld [vmem:[#allocation9 + $0x18] sm:$0xff]
    %v239 = vmul.f32 %v194, %v235
    %v240 = vmul.f32 %v194, %v236
    %v241 = vmul.f32 %v194, %v237
    %v242 = vmul.f32 %v194, %v238
    %v243 = vmul.f32 %v197, %v235
    %v244 = vmul.f32 %v197, %v236
    %v245 = vmul.f32 %v197, %v237
    %v246 = vmul.f32 %v197, %v238
    %v247 = vmul.f32 %v230, %v235
    %v248 = vmul.f32 %v230, %v236
    %v249 = vmul.f32 %v230, %v237
    %v250 = vmul.f32 %v230, %v238
    %v251 = vmul.f32 %v233, %v235
    %v252 = vmul.f32 %v233, %v236
    %v253 = vmul.f32 %v233, %v237
    %v254 = vmul.f32 %v233, %v238
    %v256 = vsel %vm133, %v158, 0
    %v259 = vsel %vm133, %v239, 0
    %261 = vmatpush.xpose.msra.mxu0 0.0
    %262 = vmatpush.xpose.msra.mxu0 0.0
    %263 = vmatpush.xpose.msra.mxu0 0.0
    %264 = vmatpush.xpose.msra.mxu0 0.0
    %265 = vmatpush.xpose.msra.mxu0 0.0
    %266 = vmatpush.xpose.msra.mxu0 0.0
    %267 = vmatpush.xpose.msra.mxu0 0.0
    %268 = vmatpush.xpose.msra.mxu0 0.0
    %269 = vmatpush.xpose.msra.mxu0 0.0
    %270 = vmatpush.xpose.msra.mxu0 0.0
    %271 = vmatpush.xpose.msra.mxu0 0.0
    %272 = vmatpush.xpose.msra.mxu0 0.0
    %273 = vmatpush.xpose.msra.mxu0 0.0
    %274 = vmatpush.xpose.msra.mxu0 0.0
    %275 = vmatpush.xpose.msra.mxu0 0.0
    %276 = vmatpush.xpose.msra.mxu0 %v259
    %277 = vmatmul.f32.gmra.mxu0 %v256
    %v278 = vpop.f32.mrf.mxu0
    %v279 = vadd.f32 0.0, %v278
    %280 = vdwg.mxu0
    %v282 = vsel %vm133, %v240, 0
    %284 = vmatpush.xpose.msra.mxu0 0.0
    %285 = vmatpush.xpose.msra.mxu0 0.0
    %286 = vmatpush.xpose.msra.mxu0 0.0
    %287 = vmatpush.xpose.msra.mxu0 0.0
    %288 = vmatpush.xpose.msra.mxu0 0.0
    %289 = vmatpush.xpose.msra.mxu0 0.0
    %290 = vmatpush.xpose.msra.mxu0 0.0
    %291 = vmatpush.xpose.msra.mxu0 0.0
    %292 = vmatpush.xpose.msra.mxu0 0.0
    %293 = vmatpush.xpose.msra.mxu0 0.0
    %294 = vmatpush.xpose.msra.mxu0 0.0
    %295 = vmatpush.xpose.msra.mxu0 0.0
    %296 = vmatpush.xpose.msra.mxu0 0.0
    %297 = vmatpush.xpose.msra.mxu0 0.0
    %298 = vmatpush.xpose.msra.mxu0 0.0
    %299 = vmatpush.xpose.msra.mxu0 %v282
    %300 = vmatmul.f32.gmra.mxu0 %v256
    %v301 = vpop.f32.mrf.mxu0
    %v302 = vadd.f32 0.0, %v301
    %303 = vdwg.mxu0
    %v305 = vsel %vm133, %v241, 0
    %307 = vmatpush.xpose.msra.mxu0 0.0
    %308 = vmatpush.xpose.msra.mxu0 0.0
    %309 = vmatpush.xpose.msra.mxu0 0.0
    %310 = vmatpush.xpose.msra.mxu0 0.0
    %311 = vmatpush.xpose.msra.mxu0 0.0
    %312 = vmatpush.xpose.msra.mxu0 0.0
    %313 = vmatpush.xpose.msra.mxu0 0.0
    %314 = vmatpush.xpose.msra.mxu0 0.0
    %315 = vmatpush.xpose.msra.mxu0 0.0
    %316 = vmatpush.xpose.msra.mxu0 0.0
    %317 = vmatpush.xpose.msra.mxu0 0.0
    %318 = vmatpush.xpose.msra.mxu0 0.0
    %319 = vmatpush.xpose.msra.mxu0 0.0
    %320 = vmatpush.xpose.msra.mxu0 0.0
    %321 = vmatpush.xpose.msra.mxu0 0.0
    %322 = vmatpush.xpose.msra.mxu0 %v305
    %323 = vmatmul.f32.gmra.mxu0 %v256
    %v324 = vpop.f32.mrf.mxu0
    %v325 = vadd.f32 0.0, %v324
    %326 = vdwg.mxu0
    %v328 = vsel %vm133, %v242, 0
    %330 = vmatpush.xpose.msra.mxu0 0.0
    %331 = vmatpush.xpose.msra.mxu0 0.0
    %332 = vmatpush.xpose.msra.mxu0 0.0
    %333 = vmatpush.xpose.msra.mxu0 0.0
    %334 = vmatpush.xpose.msra.mxu0 0.0
    %335 = vmatpush.xpose.msra.mxu0 0.0
    %336 = vmatpush.xpose.msra.mxu0 0.0
    %337 = vmatpush.xpose.msra.mxu0 0.0
    %338 = vmatpush.xpose.msra.mxu0 0.0
    %339 = vmatpush.xpose.msra.mxu0 0.0
    %340 = vmatpush.xpose.msra.mxu0 0.0
    %341 = vmatpush.xpose.msra.mxu0 0.0
    %342 = vmatpush.xpose.msra.mxu0 0.0
    %343 = vmatpush.xpose.msra.mxu0 0.0
    %344 = vmatpush.xpose.msra.mxu0 0.0
    %345 = vmatpush.xpose.msra.mxu0 %v328
    %346 = vmatmul.f32.gmra.mxu0 %v256
    %v347 = vpop.f32.mrf.mxu0
    %v348 = vadd.f32 0.0, %v347
    %349 = vdwg.mxu0
    %v351 = vsel %vm133, %v161, 0
    %v354 = vsel %vm133, %v243, 0
    %356 = vmatpush.xpose.msra.mxu0 0.0
    %357 = vmatpush.xpose.msra.mxu0 0.0
    %358 = vmatpush.xpose.msra.mxu0 0.0
    %359 = vmatpush.xpose.msra.mxu0 0.0
    %360 = vmatpush.xpose.msra.mxu0 0.0
    %361 = vmatpush.xpose.msra.mxu0 0.0
    %362 = vmatpush.xpose.msra.mxu0 0.0
    %363 = vmatpush.xpose.msra.mxu0 0.0
    %364 = vmatpush.xpose.msra.mxu0 0.0
    %365 = vmatpush.xpose.msra.mxu0 0.0
    %366 = vmatpush.xpose.msra.mxu0 0.0
    %367 = vmatpush.xpose.msra.mxu0 0.0
    %368 = vmatpush.xpose.msra.mxu0 0.0
    %369 = vmatpush.xpose.msra.mxu0 0.0
    %370 = vmatpush.xpose.msra.mxu0 0.0
    %371 = vmatpush.xpose.msra.mxu0 %v354
    %372 = vmatmul.f32.gmra.mxu0 %v351
    %v373 = vpop.f32.mrf.mxu0
    %v374 = vadd.f32 0.0, %v373
    %375 = vdwg.mxu0
    %v377 = vsel %vm133, %v244, 0
    %379 = vmatpush.xpose.msra.mxu0 0.0
    %380 = vmatpush.xpose.msra.mxu0 0.0
    %381 = vmatpush.xpose.msra.mxu0 0.0
    %382 = vmatpush.xpose.msra.mxu0 0.0
    %383 = vmatpush.xpose.msra.mxu0 0.0
    %384 = vmatpush.xpose.msra.mxu0 0.0
    %385 = vmatpush.xpose.msra.mxu0 0.0
    %386 = vmatpush.xpose.msra.mxu0 0.0
    %387 = vmatpush.xpose.msra.mxu0 0.0
    %388 = vmatpush.xpose.msra.mxu0 0.0
    %389 = vmatpush.xpose.msra.mxu0 0.0
    %390 = vmatpush.xpose.msra.mxu0 0.0
    %391 = vmatpush.xpose.msra.mxu0 0.0
    %392 = vmatpush.xpose.msra.mxu0 0.0
    %393 = vmatpush.xpose.msra.mxu0 0.0
    %394 = vmatpush.xpose.msra.mxu0 %v377
    %395 = vmatmul.f32.gmra.mxu0 %v351
    %v396 = vpop.f32.mrf.mxu0
    %v397 = vadd.f32 0.0, %v396
    %398 = vdwg.mxu0
    %v400 = vsel %vm133, %v245, 0
    %402 = vmatpush.xpose.msra.mxu0 0.0
    %403 = vmatpush.xpose.msra.mxu0 0.0
    %404 = vmatpush.xpose.msra.mxu0 0.0
    %405 = vmatpush.xpose.msra.mxu0 0.0
    %406 = vmatpush.xpose.msra.mxu0 0.0
    %407 = vmatpush.xpose.msra.mxu0 0.0
    %408 = vmatpush.xpose.msra.mxu0 0.0
    %409 = vmatpush.xpose.msra.mxu0 0.0
    %410 = vmatpush.xpose.msra.mxu0 0.0
    %411 = vmatpush.xpose.msra.mxu0 0.0
    %412 = vmatpush.xpose.msra.mxu0 0.0
    %413 = vmatpush.xpose.msra.mxu0 0.0
    %414 = vmatpush.xpose.msra.mxu0 0.0
    %415 = vmatpush.xpose.msra.mxu0 0.0
    %416 = vmatpush.xpose.msra.mxu0 0.0
    %417 = vmatpush.xpose.msra.mxu0 %v400
    %418 = vmatmul.f32.gmra.mxu0 %v351
    %v419 = vpop.f32.mrf.mxu0
    %v420 = vadd.f32 0.0, %v419
    %421 = vdwg.mxu0
    %v423 = vsel %vm133, %v246, 0
    %425 = vmatpush.xpose.msra.mxu0 0.0
    %426 = vmatpush.xpose.msra.mxu0 0.0
    %427 = vmatpush.xpose.msra.mxu0 0.0
    %428 = vmatpush.xpose.msra.mxu0 0.0
    %429 = vmatpush.xpose.msra.mxu0 0.0
    %430 = vmatpush.xpose.msra.mxu0 0.0
    %431 = vmatpush.xpose.msra.mxu0 0.0
    %432 = vmatpush.xpose.msra.mxu0 0.0
    %433 = vmatpush.xpose.msra.mxu0 0.0
    %434 = vmatpush.xpose.msra.mxu0 0.0
    %435 = vmatpush.xpose.msra.mxu0 0.0
    %436 = vmatpush.xpose.msra.mxu0 0.0
    %437 = vmatpush.xpose.msra.mxu0 0.0
    %438 = vmatpush.xpose.msra.mxu0 0.0
    %439 = vmatpush.xpose.msra.mxu0 0.0
    %440 = vmatpush.xpose.msra.mxu0 %v423
    %441 = vmatmul.f32.gmra.mxu0 %v351
    %v442 = vpop.f32.mrf.mxu0
    %v443 = vadd.f32 0.0, %v442
    %444 = vdwg.mxu0
    %vm445 = vcmask 64512
    %v446 = vsel %vm445, %v279, -inf
    %447 = vmax.xlane.f32.xlu0 %v446
    %v448 = vpop.xlane.xlu0 %447
    %v449 = vsel %vm445, %v302, -inf
    %450 = vmax.xlane.f32.xlu0 %v449
    %v451 = vpop.xlane.xlu0 %450
    %v452 = vsel %vm445, %v325, -inf
    %453 = vmax.xlane.f32.xlu0 %v452
    %v454 = vpop.xlane.xlu0 %453
    %v455 = vsel %vm445, %v348, -inf
    %456 = vmax.xlane.f32.xlu0 %v455
    %v457 = vpop.xlane.xlu0 %456
    %v458 = vsel %vm445, %v374, -inf
    %459 = vmax.xlane.f32.xlu0 %v458
    %v460 = vpop.xlane.xlu0 %459
    %v461 = vsel %vm445, %v397, -inf
    %462 = vmax.xlane.f32.xlu0 %v461
    %v463 = vpop.xlane.xlu0 %462
    %v464 = vsel %vm445, %v420, -inf
    %465 = vmax.xlane.f32.xlu0 %v464
    %v466 = vpop.xlane.xlu0 %465
    %v467 = vsel %vm445, %v443, -inf
    %468 = vmax.xlane.f32.xlu0 %v467
    %v469 = vpop.xlane.xlu0 %468
    %v470 = vsub.f32 %v279, %v448
    %v471 = vsub.f32 %v302, %v451
    %v472 = vsub.f32 %v325, %v454
    %v473 = vsub.f32 %v348, %v457
    %v474 = vsub.f32 %v374, %v460
    %v475 = vsub.f32 %v397, %v463
    %v476 = vsub.f32 %v420, %v466
    %v477 = vsub.f32 %v443, %v469
    %v478 = vmul.f32 %v470, 1.442695
    %v479 = vpow.pop %v478
    %v480 = vmul.f32 %v471, 1.442695
    %v481 = vpow.pop %v480
    %v482 = vmul.f32 %v472, 1.442695
    %v483 = vpow.pop %v482
    %v484 = vmul.f32 %v473, 1.442695
    %v485 = vpow.pop %v484
    %v486 = vmul.f32 %v474, 1.442695
    %v487 = vpow.pop %v486
    %v488 = vmul.f32 %v475, 1.442695
    %v489 = vpow.pop %v488
    %v490 = vmul.f32 %v476, 1.442695
    %v491 = vpow.pop %v490
    %v492 = vmul.f32 %v477, 1.442695
    %v493 = vpow.pop %v492
    %v494 = vsel %vm445, %v479, 0.0
    %495 = vadd.xlane.f32.xlu0 %v494
    %v496 = vpop.xlane.xlu0 %495
    %v497 = vsel %vm445, %v481, 0.0
    %498 = vadd.xlane.f32.xlu0 %v497
    %v499 = vpop.xlane.xlu0 %498
    %v500 = vsel %vm445, %v483, 0.0
    %501 = vadd.xlane.f32.xlu0 %v500
    %v502 = vpop.xlane.xlu0 %501
    %v503 = vsel %vm445, %v485, 0.0
    %504 = vadd.xlane.f32.xlu0 %v503
    %v505 = vpop.xlane.xlu0 %504
    %v506 = vsel %vm445, %v487, 0.0
    %507 = vadd.xlane.f32.xlu0 %v506
    %v508 = vpop.xlane.xlu0 %507
    %v509 = vsel %vm445, %v489, 0.0
    %510 = vadd.xlane.f32.xlu0 %v509
    %v511 = vpop.xlane.xlu0 %510
    %v512 = vsel %vm445, %v491, 0.0
    %513 = vadd.xlane.f32.xlu0 %v512
    %v514 = vpop.xlane.xlu0 %513
    %v515 = vsel %vm445, %v493, 0.0
    %516 = vadd.xlane.f32.xlu0 %v515
    %v517 = vpop.xlane.xlu0 %516
    %v518 = vrcp.pop %v496
    %v519 = vrcp.pop %v499
    %v520 = vrcp.pop %v502
    %v521 = vrcp.pop %v505
    %v522 = vrcp.pop %v508
    %v523 = vrcp.pop %v511
    %v524 = vrcp.pop %v514
    %v525 = vrcp.pop %v517
    %v526 = vmul.f32 %v479, %v518
    %v527 = vmul.f32 %v481, %v519
    %v528 = vmul.f32 %v483, %v520
    %v529 = vmul.f32 %v485, %v521
    %v530 = vmul.f32 %v487, %v522
    %v531 = vmul.f32 %v489, %v523
    %v532 = vmul.f32 %v491, %v524
    %v533 = vmul.f32 %v493, %v525
    %v535 = vsel %vm445, %v526, 0
    %537 = vmatpush.msra.mxu0 0.0
    %538 = vmatpush.msra.mxu0 0.0
    %539 = vmatpush.msra.mxu0 0.0
    %540 = vmatpush.msra.mxu0 0.0
    %541 = vmatpush.msra.mxu0 0.0
    %542 = vmatpush.msra.mxu0 0.0
    %543 = vmatpush.msra.mxu0 0.0
    %544 = vmatpush.msra.mxu0 0.0
    %545 = vmatpush.msra.mxu0 0.0
    %546 = vmatpush.msra.mxu0 0.0
    %547 = vmatpush.msra.mxu0 0.0
    %548 = vmatpush.msra.mxu0 0.0
    %549 = vmatpush.msra.mxu0 0.0
    %550 = vmatpush.msra.mxu0 0.0
    %551 = vmatpush.msra.mxu0 0.0
    %552 = vmatpush.msra.mxu0 %v247
    %553 = vmatmul.f32.gmra.mxu0 %v535
    %v554 = vpop.f32.mrf.mxu0
    %v555 = vadd.f32 0.0, %v554
    %556 = vdwg.mxu0
    %v558 = vsel %vm445, %v527, 0
    %560 = vmatpush.msra.mxu0 0.0
    %561 = vmatpush.msra.mxu0 0.0
    %562 = vmatpush.msra.mxu0 0.0
    %563 = vmatpush.msra.mxu0 0.0
    %564 = vmatpush.msra.mxu0 0.0
    %565 = vmatpush.msra.mxu0 0.0
    %566 = vmatpush.msra.mxu0 0.0
    %567 = vmatpush.msra.mxu0 0.0
    %568 = vmatpush.msra.mxu0 0.0
    %569 = vmatpush.msra.mxu0 0.0
    %570 = vmatpush.msra.mxu0 0.0
    %571 = vmatpush.msra.mxu0 0.0
    %572 = vmatpush.msra.mxu0 0.0
    %573 = vmatpush.msra.mxu0 0.0
    %574 = vmatpush.msra.mxu0 0.0
    %575 = vmatpush.msra.mxu0 %v248
    %576 = vmatmul.f32.gmra.mxu0 %v558
    %v577 = vpop.f32.mrf.mxu0
    %v578 = vadd.f32 0.0, %v577
    %579 = vdwg.mxu0
    %v581 = vsel %vm445, %v528, 0
    %583 = vmatpush.msra.mxu0 0.0
    %584 = vmatpush.msra.mxu0 0.0
    %585 = vmatpush.msra.mxu0 0.0
    %586 = vmatpush.msra.mxu0 0.0
    %587 = vmatpush.msra.mxu0 0.0
    %588 = vmatpush.msra.mxu0 0.0
    %589 = vmatpush.msra.mxu0 0.0
    %590 = vmatpush.msra.mxu0 0.0
    %591 = vmatpush.msra.mxu0 0.0
    %592 = vmatpush.msra.mxu0 0.0
    %593 = vmatpush.msra.mxu0 0.0
    %594 = vmatpush.msra.mxu0 0.0
    %595 = vmatpush.msra.mxu0 0.0
    %596 = vmatpush.msra.mxu0 0.0
    %597 = vmatpush.msra.mxu0 0.0
    %598 = vmatpush.msra.mxu0 %v249
    %599 = vmatmul.f32.gmra.mxu0 %v581
    %v600 = vpop.f32.mrf.mxu0
    %v601 = vadd.f32 0.0, %v600
    %602 = vdwg.mxu0
    %v604 = vsel %vm445, %v529, 0
    %606 = vmatpush.msra.mxu0 0.0
    %607 = vmatpush.msra.mxu0 0.0
    %608 = vmatpush.msra.mxu0 0.0
    %609 = vmatpush.msra.mxu0 0.0
    %610 = vmatpush.msra.mxu0 0.0
    %611 = vmatpush.msra.mxu0 0.0
    %612 = vmatpush.msra.mxu0 0.0
    %613 = vmatpush.msra.mxu0 0.0
    %614 = vmatpush.msra.mxu0 0.0
    %615 = vmatpush.msra.mxu0 0.0
    %616 = vmatpush.msra.mxu0 0.0
    %617 = vmatpush.msra.mxu0 0.0
    %618 = vmatpush.msra.mxu0 0.0
    %619 = vmatpush.msra.mxu0 0.0
    %620 = vmatpush.msra.mxu0 0.0
    %621 = vmatpush.msra.mxu0 %v250
    %622 = vmatmul.f32.gmra.mxu0 %v604
    %v623 = vpop.f32.mrf.mxu0
    %v624 = vadd.f32 0.0, %v623
    %625 = vdwg.mxu0
    %v627 = vsel %vm445, %v530, 0
    %629 = vmatpush.msra.mxu0 0.0
    %630 = vmatpush.msra.mxu0 0.0
    %631 = vmatpush.msra.mxu0 0.0
    %632 = vmatpush.msra.mxu0 0.0
    %633 = vmatpush.msra.mxu0 0.0
    %634 = vmatpush.msra.mxu0 0.0
    %635 = vmatpush.msra.mxu0 0.0
    %636 = vmatpush.msra.mxu0 0.0
    %637 = vmatpush.msra.mxu0 0.0
    %638 = vmatpush.msra.mxu0 0.0
    %639 = vmatpush.msra.mxu0 0.0
    %640 = vmatpush.msra.mxu0 0.0
    %641 = vmatpush.msra.mxu0 0.0
    %642 = vmatpush.msra.mxu0 0.0
    %643 = vmatpush.msra.mxu0 0.0
    %644 = vmatpush.msra.mxu0 %v251
    %645 = vmatmul.f32.gmra.mxu0 %v627
    %v646 = vpop.f32.mrf.mxu0
    %v647 = vadd.f32 0.0, %v646
    %648 = vdwg.mxu0
    %v650 = vsel %vm445, %v531, 0
    %652 = vmatpush.msra.mxu0 0.0
    %653 = vmatpush.msra.mxu0 0.0
    %654 = vmatpush.msra.mxu0 0.0
    %655 = vmatpush.msra.mxu0 0.0
    %656 = vmatpush.msra.mxu0 0.0
    %657 = vmatpush.msra.mxu0 0.0
    %658 = vmatpush.msra.mxu0 0.0
    %659 = vmatpush.msra.mxu0 0.0
    %660 = vmatpush.msra.mxu0 0.0
    %661 = vmatpush.msra.mxu0 0.0
    %662 = vmatpush.msra.mxu0 0.0
    %663 = vmatpush.msra.mxu0 0.0
    %664 = vmatpush.msra.mxu0 0.0
    %665 = vmatpush.msra.mxu0 0.0
    %666 = vmatpush.msra.mxu0 0.0
    %667 = vmatpush.msra.mxu0 %v252
    %668 = vmatmul.f32.gmra.mxu0 %v650
    %v669 = vpop.f32.mrf.mxu0
    %v670 = vadd.f32 0.0, %v669
    %671 = vdwg.mxu0
    %v673 = vsel %vm445, %v532, 0
    %675 = vmatpush.msra.mxu0 0.0
    %676 = vmatpush.msra.mxu0 0.0
    %677 = vmatpush.msra.mxu0 0.0
    %678 = vmatpush.msra.mxu0 0.0
    %679 = vmatpush.msra.mxu0 0.0
    %680 = vmatpush.msra.mxu0 0.0
    %681 = vmatpush.msra.mxu0 0.0
    %682 = vmatpush.msra.mxu0 0.0
    %683 = vmatpush.msra.mxu0 0.0
    %684 = vmatpush.msra.mxu0 0.0
    %685 = vmatpush.msra.mxu0 0.0
    %686 = vmatpush.msra.mxu0 0.0
    %687 = vmatpush.msra.mxu0 0.0
    %688 = vmatpush.msra.mxu0 0.0
    %689 = vmatpush.msra.mxu0 0.0
    %690 = vmatpush.msra.mxu0 %v253
    %691 = vmatmul.f32.gmra.mxu0 %v673
    %v692 = vpop.f32.mrf.mxu0
    %v693 = vadd.f32 0.0, %v692
    %694 = vdwg.mxu0
    %v696 = vsel %vm445, %v533, 0
    %698 = vmatpush.msra.mxu0 0.0
    %699 = vmatpush.msra.mxu0 0.0
    %700 = vmatpush.msra.mxu0 0.0
    %701 = vmatpush.msra.mxu0 0.0
    %702 = vmatpush.msra.mxu0 0.0
    %703 = vmatpush.msra.mxu0 0.0
    %704 = vmatpush.msra.mxu0 0.0
    %705 = vmatpush.msra.mxu0 0.0
    %706 = vmatpush.msra.mxu0 0.0
    %707 = vmatpush.msra.mxu0 0.0
    %708 = vmatpush.msra.mxu0 0.0
    %709 = vmatpush.msra.mxu0 0.0
    %710 = vmatpush.msra.mxu0 0.0
    %711 = vmatpush.msra.mxu0 0.0
    %712 = vmatpush.msra.mxu0 0.0
    %713 = vmatpush.msra.mxu0 %v254
    %714 = vmatmul.f32.gmra.mxu0 %v696
    %v715 = vpop.f32.mrf.mxu0
    %v716 = vadd.f32 0.0, %v715
    %717 = vdwg.mxu0
    %v718 = vsel %vm133, %v555, 0.0
    %v719 = vsel %vm133, %v578, 0.0
    %v720 = vadd.f32 %v718, %v719
    %v721 = vsel %vm133, %v601, 0.0
    %v722 = vadd.f32 %v720, %v721
    %v723 = vsel %vm133, %v624, 0.0
    %v724 = vadd.f32 %v722, %v723
    %v725 = vsel %vm133, %v647, 0.0
    %v726 = vsel %vm133, %v670, 0.0
    %v727 = vadd.f32 %v725, %v726
    %v728 = vsel %vm133, %v693, 0.0
    %v729 = vadd.f32 %v727, %v728
    %v730 = vsel %vm133, %v716, 0.0
    %v731 = vadd.f32 %v729, %v730
    %v732 = vld [vmem:[#allocation10] sm:$0xff]
    %v733 = vld [vmem:[#allocation10 + $0x8] sm:$0xff]
    %v734 = vld [vmem:[#allocation10 + $0x10] sm:$0xff]
    %v735 = vld [vmem:[#allocation10 + $0x18] sm:$0xff]
    %v736 = vld [vmem:[%s7] sm:$0x1]
    %v738 = vperm.slane %v736, 0
    %v741 = vsel %vm133, %v724, 0
    %v744 = vsel %vm133, %v731, 0
    %746 = vmatpush.msra.mxu0 0.0
    %747 = vmatpush.msra.mxu0 0.0
    %748 = vmatpush.msra.mxu0 0.0
    %749 = vmatpush.msra.mxu0 0.0
    %750 = vmatpush.msra.mxu0 0.0
    %751 = vmatpush.msra.mxu0 0.0
    %752 = vmatpush.msra.mxu0 0.0
    %753 = vmatpush.msra.mxu0 0.0
    %754 = vmatpush.msra.mxu0 0.0
    %755 = vmatpush.msra.mxu0 0.0
    %756 = vmatpush.msra.mxu0 0.0
    %757 = vmatpush.msra.mxu0 0.0
    %758 = vmatpush.msra.mxu0 %v735
    %759 = vmatpush.msra.mxu0 %v734
    %760 = vmatpush.msra.mxu0 %v733
    %761 = vmatpush.msra.mxu0 %v732
    %762 = vmatmul.f32.gmra.mxu0 %v741
    %v763 = vpop.f32.mrf.mxu0
    %v764 = vadd.f32 %v738, %v763
    %765 = vmatmul.f32.gmra.mxu0 %v744
    %v766 = vpop.f32.mrf.mxu0
    %v767 = vadd.f32 %v738, %v766
    %768 = vdwg.mxu0
    %769 = vst [vmem:[%s8] sm:$0xff] %v764
    %770 = vst [vmem:[%s8 + $0x8] sm:$0xff] %v767
    // Predicated region
    $region58: #{cyclic_attention.1} parent=1 // pred_check
      _
    $region59: #{cyclic_attention.1} parent=1 // pred_check_branch
      %772 = sbr.rel (0) target = $region61
    $region60: #{cyclic_attention.1} parent=1 // pred_region
      _
    $region61: #{cyclic_attention.1} parent=1 // pred_fallthru
      _
    // Predicated region
    $region62: #{cyclic_attention.1} parent=1 // pred_check
      _
    $region63: #{cyclic_attention.1} parent=1 // pred_check_branch
      %774 = sbr.rel (0) target = $region65
    $region64: #{cyclic_attention.1} parent=1 // pred_region
      _
    $region65: #{cyclic_attention.1} parent=1 // pred_fallthru
      _
    %775 = vsyncpa [#allocation3], 1
    %776 = vsyncpa [#allocation5], 1
    %777 = vsyncpa [#allocation8], 1
    %778 = vsyncpa [#allocation11], 1

</llo_original>
